<compile_context>
chip_gen: v7x
topology: tpu7x:2x2x1
jax: 0.10.0
libtpu: 0.0.40
codegen_flags: <defaults>
</compile_context>

<pallas_src>
import functools

import jax
import jax.numpy as jnp
from jax.experimental import pallas as pl
from jax.experimental.pallas import tpu as pltpu


def _unfold_rows_kernel(x_ref, o_ref, *, kh, kw, w, hw, tc):
    """Copy contiguous row-windows into the unfold output block.

    x_ref: (1, tc, kw, hp*w)    kw column-shifted, row-flattened padded planes
    o_ref: (1, tc*kh*kw, h*w)   final unfold rows for this channel chunk

    Output row (lc*kh*kw + i*kw + j) is the contiguous slice
    x_ref[0, lc, j, i*w : i*w + h*w]; we move all kw of them (j = 0..kw-1,
    consecutive output rows, consecutive input sublanes) in a single static
    2-D copy per (channel, kernel-row) pair.
    """
    kk = kh * kw
    for lc in range(tc):            # static unroll: channels in this chunk
        for i in range(kh):         # static unroll: kernel-row offsets
            r0 = lc * kk + i * kw
            o_ref[0, r0:r0 + kw, :] = x_ref[0, lc, :, i * w:i * w + hw]


def _pick_channel_tile(c, per_channel_bytes, budget=8 * 1024 * 1024):
    """Largest channel tile whose (input + output) blocks fit a VMEM budget.

    Prefers the full channel dim (block == full array dims is always legal);
    otherwise a multiple-of-8 divisor of c so the output block's second-minor
    dim (tc*kh*kw) stays sublane-aligned.
    """
    if c * per_channel_bytes <= budget:
        return c
    best = 0
    for cand in range(8, c, 8):
        if c % cand == 0 and cand * per_channel_bytes <= budget:
            best = cand
    return best if best else c      # fall back to full c (always legal)


@functools.partial(jax.jit, static_argnums=1)
def global_local_converter(x, local_size):
    """Pallas equivalent of GlobalLocalConverter(local_size).forward(x).

    x: (n, c, h, w) float array (NCHW, like PyTorch).
    returns: (n, c*kh*kw, h*w), matching F.pad + F.unfold semantics exactly.
    """
    kh, kw = local_size
    n, c, h, w = x.shape
    kk = kh * kw
    hw = h * w
    hp = h + kh - 1

    # padding = sum([[t - 1 - t//2, t//2] for t in local_size[::-1]], [])
    # F.pad with 4 values pads (left, right, top, bottom):
    pad_left, pad_right = kw - 1 - kw // 2, kw // 2
    pad_top, pad_bottom = kh - 1 - kh // 2, kh // 2
    xp = jnp.pad(
        x, ((0, 0), (0, 0), (pad_top, pad_bottom), (pad_left, pad_right))
    )  # (n, c, hp, wp)

    # kw column-shifted views of the padded image, flattened to (hp*w)-long
    # rows.  XLA fuses pad + slices + stack into one pass producing x2.
    # x2[b, ci, j, r*w + ow] == padded_X[b, ci, r, ow + j]
    # TODO(synk): folding this shift/pad stage into the Pallas kernel would
    # require per-row lane compaction in VMEM (wp != w), which makes the
    # kernel vector-bound; it is intentionally left as cheap XLA glue.
    x2 = jnp.stack([xp[:, :, :, j:j + w] for j in range(kw)], axis=2)
    x2 = x2.reshape(n, c, kw, hp * w)

    itemsize = x.dtype.itemsize
    per_channel_bytes = (kw * hp * w + kk * hw) * itemsize
    tc = _pick_channel_tile(c, per_channel_bytes)
    block_pair_bytes = tc * per_channel_bytes
    vmem_limit = int(min(max(4 * block_pair_bytes, 32 * 1024 * 1024),
                         64 * 1024 * 1024))

    return pl.pallas_call(
        functools.partial(_unfold_rows_kernel, kh=kh, kw=kw, w=w, hw=hw, tc=tc),
        out_shape=jax.ShapeDtypeStruct((n, c * kk, hw), x.dtype),
        grid=(n, c // tc),
        in_specs=[
            # Full kw planes for this channel chunk; last two dims are full
            # array dims so no (8,128) divisibility issues.
            pl.BlockSpec((1, tc, kw, hp * w), lambda b, cc: (b, cc, 0, 0)),
        ],
        # Lane-dense output block: minor dim is h*w, second-minor is tc*kk
        # rows (contiguous in the final layout -> no trailing reshape).
        out_specs=pl.BlockSpec((1, tc * kk, hw), lambda b, cc: (b, cc, 0)),
        compiler_params=pltpu.CompilerParams(
            dimension_semantics=("parallel", "parallel"),
            vmem_limit_bytes=vmem_limit,
        ),
    )(x2)


def _unfold_reference(x, local_size):
    """Pure-JAX reference mirroring F.pad + F.unfold for validation."""
    kh, kw = local_size
    n, c, h, w = x.shape
    xp = jnp.pad(
        x,
        ((0, 0), (0, 0),
         (kh - 1 - kh // 2, kh // 2),
         (kw - 1 - kw // 2, kw // 2)),
    )
    cols = []
    for i in range(kh):
        for j in range(kw):
            cols.append(xp[:, :, i:i + h, j:j + w])
    ref = jnp.stack(cols, axis=2)  # (n, c, kh*kw, h, w)
    return ref.reshape(n, c * kh * kw, h * w)


if __name__ == "__main__":
    # Primary check: batch=2, channels=4, 16x16 spatial, 3x3 local window.
    local_size = (3, 3)
    key = jax.random.PRNGKey(0)
    x = jax.random.normal(key, (2, 4, 16, 16), dtype=jnp.float32)

    out = jax.block_until_ready(global_local_converter(x, local_size))
    expected = _unfold_reference(x, local_size)
    assert out.shape == (2, 4 * 9, 16 * 16), out.shape
    assert jnp.allclose(out, expected), "Pallas unfold does not match reference"

    # Secondary check: asymmetric window + non-square spatial dims.
    x_b = jax.random.normal(jax.random.PRNGKey(1), (1, 3, 8, 12), dtype=jnp.float32)
    out_b = jax.block_until_ready(global_local_converter(x_b, (2, 3)))
    exp_b = _unfold_reference(x_b, (2, 3))
    assert out_b.shape == (1, 3 * 6, 8 * 12), out_b.shape
    assert jnp.allclose(out_b, exp_b), "Pallas unfold (2,3) does not match reference"

    print("KERNEL_OK")
</pallas_src>

<mosaic_0001>
module attributes {stable_mosaic.version = 11 : i64} {
  func.func @_unfold_rows_kernel(%arg0: i32, %arg1: i32, %arg2: memref<1x4x3x288xf32, #tpu.memory_space<vmem>>, %arg3: memref<1x36x256xf32, #tpu.memory_space<vmem>>) attributes {dimension_semantics = [#tpu.dimension_semantics<parallel>, #tpu.dimension_semantics<parallel>], iteration_bounds = array<i64: 2, 1>, scalar_prefetch = 0 : i64, scratch_operands = 0 : i64, tpu.core_type = #tpu.core_type<tc>, window_params = [{transform_indices = @transform_0, window_bounds = array<i64: 1, 4, 3, 288>}, {transform_indices = @transform_1, window_bounds = array<i64: 1, 36, 256>}]} {
    %c0 = arith.constant 0 : index
    %c0_0 = arith.constant 0 : index
    %c0_1 = arith.constant 0 : index
    %c0_2 = arith.constant 0 : index
    %0 = vector.load %arg2[%c0, %c0_0, %c0_1, %c0_2] : memref<1x4x3x288xf32, #tpu.memory_space<vmem>>, vector<1x1x3x256xf32>
    %1 = vector.shape_cast %0 : vector<1x1x3x256xf32> to vector<3x256xf32>
    %c0_3 = arith.constant 0 : index
    %c0_4 = arith.constant 0 : index
    %c0_5 = arith.constant 0 : index
    %2 = vector.load %arg3[%c0_3, %c0_4, %c0_5] : memref<1x36x256xf32, #tpu.memory_space<vmem>>, vector<1x3x256xf32>
    %3 = vector.shape_cast %2 : vector<1x3x256xf32> to vector<3x256xf32>
    %4 = vector.shape_cast %1 : vector<3x256xf32> to vector<1x3x256xf32>
    tpu.vector_store %arg3[%c0_3, %c0_4, %c0_5], %4 {strides = array<i32>} : memref<1x36x256xf32, #tpu.memory_space<vmem>>, vector<1x3x256xf32>,
    %c0_6 = arith.constant 0 : index
    %c0_7 = arith.constant 0 : index
    %c0_8 = arith.constant 0 : index
    %c16 = arith.constant 16 : index
    %5 = vector.load %arg2[%c0_6, %c0_7, %c0_8, %c16] : memref<1x4x3x288xf32, #tpu.memory_space<vmem>>, vector<1x1x3x256xf32>
    %6 = vector.shape_cast %5 : vector<1x1x3x256xf32> to vector<3x256xf32>
    %c0_9 = arith.constant 0 : index
    %c3 = arith.constant 3 : index
    %c0_10 = arith.constant 0 : index
    %7 = vector.load %arg3[%c0_9, %c3, %c0_10] : memref<1x36x256xf32, #tpu.memory_space<vmem>>, vector<1x3x256xf32>
    %8 = vector.shape_cast %7 : vector<1x3x256xf32> to vector<3x256xf32>
    %9 = vector.shape_cast %6 : vector<3x256xf32> to vector<1x3x256xf32>
    tpu.vector_store %arg3[%c0_9, %c3, %c0_10], %9 {strides = array<i32>} : memref<1x36x256xf32, #tpu.memory_space<vmem>>, vector<1x3x256xf32>,
    %c0_11 = arith.constant 0 : index
    %c0_12 = arith.constant 0 : index
    %c0_13 = arith.constant 0 : index
    %c32 = arith.constant 32 : index
    %10 = vector.load %arg2[%c0_11, %c0_12, %c0_13, %c32] : memref<1x4x3x288xf32, #tpu.memory_space<vmem>>, vector<1x1x3x256xf32>
    %11 = vector.shape_cast %10 : vector<1x1x3x256xf32> to vector<3x256xf32>
    %c0_14 = arith.constant 0 : index
    %c6 = arith.constant 6 : index
    %c0_15 = arith.constant 0 : index
    %12 = vector.load %arg3[%c0_14, %c6, %c0_15] : memref<1x36x256xf32, #tpu.memory_space<vmem>>, vector<1x3x256xf32>
    %13 = vector.shape_cast %12 : vector<1x3x256xf32> to vector<3x256xf32>
    %14 = vector.shape_cast %11 : vector<3x256xf32> to vector<1x3x256xf32>
    tpu.vector_store %arg3[%c0_14, %c6, %c0_15], %14 {strides = array<i32>} : memref<1x36x256xf32, #tpu.memory_space<vmem>>, vector<1x3x256xf32>,
    %c0_16 = arith.constant 0 : index
    %c1 = arith.constant 1 : index
    %c0_17 = arith.constant 0 : index
    %c0_18 = arith.constant 0 : index
    %15 = vector.load %arg2[%c0_16, %c1, %c0_17, %c0_18] : memref<1x4x3x288xf32, #tpu.memory_space<vmem>>, vector<1x1x3x256xf32>
    %16 = vector.shape_cast %15 : vector<1x1x3x256xf32> to vector<3x256xf32>
    %c0_19 = arith.constant 0 : index
    %c9 = arith.constant 9 : index
    %c0_20 = arith.constant 0 : index
    %17 = vector.load %arg3[%c0_19, %c9, %c0_20] : memref<1x36x256xf32, #tpu.memory_space<vmem>>, vector<1x3x256xf32>
    %18 = vector.shape_cast %17 : vector<1x3x256xf32> to vector<3x256xf32>
    %19 = vector.shape_cast %16 : vector<3x256xf32> to vector<1x3x256xf32>
    tpu.vector_store %arg3[%c0_19, %c9, %c0_20], %19 {strides = array<i32>} : memref<1x36x256xf32, #tpu.memory_space<vmem>>, vector<1x3x256xf32>,
    %c0_21 = arith.constant 0 : index
    %c1_22 = arith.constant 1 : index
    %c0_23 = arith.constant 0 : index
    %c16_24 = arith.constant 16 : index
    %20 = vector.load %arg2[%c0_21, %c1_22, %c0_23, %c16_24] : memref<1x4x3x288xf32, #tpu.memory_space<vmem>>, vector<1x1x3x256xf32>
    %21 = vector.shape_cast %20 : vector<1x1x3x256xf32> to vector<3x256xf32>
    %c0_25 = arith.constant 0 : index
    %c12 = arith.constant 12 : index
    %c0_26 = arith.constant 0 : index
    %22 = vector.load %arg3[%c0_25, %c12, %c0_26] : memref<1x36x256xf32, #tpu.memory_space<vmem>>, vector<1x3x256xf32>
    %23 = vector.shape_cast %22 : vector<1x3x256xf32> to vector<3x256xf32>
    %24 = vector.shape_cast %21 : vector<3x256xf32> to vector<1x3x256xf32>
    tpu.vector_store %arg3[%c0_25, %c12, %c0_26], %24 {strides = array<i32>} : memref<1x36x256xf32, #tpu.memory_space<vmem>>, vector<1x3x256xf32>,
    %c0_27 = arith.constant 0 : index
    %c1_28 = arith.constant 1 : index
    %c0_29 = arith.constant 0 : index
    %c32_30 = arith.constant 32 : index
    %25 = vector.load %arg2[%c0_27, %c1_28, %c0_29, %c32_30] : memref<1x4x3x288xf32, #tpu.memory_space<vmem>>, vector<1x1x3x256xf32>
    %26 = vector.shape_cast %25 : vector<1x1x3x256xf32> to vector<3x256xf32>
    %c0_31 = arith.constant 0 : index
    %c15 = arith.constant 15 : index
    %c0_32 = arith.constant 0 : index
    %27 = vector.load %arg3[%c0_31, %c15, %c0_32] : memref<1x36x256xf32, #tpu.memory_space<vmem>>, vector<1x3x256xf32>
    %28 = vector.shape_cast %27 : vector<1x3x256xf32> to vector<3x256xf32>
    %29 = vector.shape_cast %26 : vector<3x256xf32> to vector<1x3x256xf32>
    tpu.vector_store %arg3[%c0_31, %c15, %c0_32], %29 {strides = array<i32>} : memref<1x36x256xf32, #tpu.memory_space<vmem>>, vector<1x3x256xf32>,
    %c0_33 = arith.constant 0 : index
    %c2 = arith.constant 2 : index
    %c0_34 = arith.constant 0 : index
    %c0_35 = arith.constant 0 : index
    %30 = vector.load %arg2[%c0_33, %c2, %c0_34, %c0_35] : memref<1x4x3x288xf32, #tpu.memory_space<vmem>>, vector<1x1x3x256xf32>
    %31 = vector.shape_cast %30 : vector<1x1x3x256xf32> to vector<3x256xf32>
    %c0_36 = arith.constant 0 : index
    %c18 = arith.constant 18 : index
    %c0_37 = arith.constant 0 : index
    %32 = vector.load %arg3[%c0_36, %c18, %c0_37] : memref<1x36x256xf32, #tpu.memory_space<vmem>>, vector<1x3x256xf32>
    %33 = vector.shape_cast %32 : vector<1x3x256xf32> to vector<3x256xf32>
    %34 = vector.shape_cast %31 : vector<3x256xf32> to vector<1x3x256xf32>
    tpu.vector_store %arg3[%c0_36, %c18, %c0_37], %34 {strides = array<i32>} : memref<1x36x256xf32, #tpu.memory_space<vmem>>, vector<1x3x256xf32>,
    %c0_38 = arith.constant 0 : index
    %c2_39 = arith.constant 2 : index
    %c0_40 = arith.constant 0 : index
    %c16_41 = arith.constant 16 : index
    %35 = vector.load %arg2[%c0_38, %c2_39, %c0_40, %c16_41] : memref<1x4x3x288xf32, #tpu.memory_space<vmem>>, vector<1x1x3x256xf32>
    %36 = vector.shape_cast %35 : vector<1x1x3x256xf32> to vector<3x256xf32>
    %c0_42 = arith.constant 0 : index
    %c21 = arith.constant 21 : index
    %c0_43 = arith.constant 0 : index
    %37 = vector.load %arg3[%c0_42, %c21, %c0_43] : memref<1x36x256xf32, #tpu.memory_space<vmem>>, vector<1x3x256xf32>
    %38 = vector.shape_cast %37 : vector<1x3x256xf32> to vector<3x256xf32>
    %39 = vector.shape_cast %36 : vector<3x256xf32> to vector<1x3x256xf32>
    tpu.vector_store %arg3[%c0_42, %c21, %c0_43], %39 {strides = array<i32>} : memref<1x36x256xf32, #tpu.memory_space<vmem>>, vector<1x3x256xf32>,
    %c0_44 = arith.constant 0 : index
    %c2_45 = arith.constant 2 : index
    %c0_46 = arith.constant 0 : index
    %c32_47 = arith.constant 32 : index
    %40 = vector.load %arg2[%c0_44, %c2_45, %c0_46, %c32_47] : memref<1x4x3x288xf32, #tpu.memory_space<vmem>>, vector<1x1x3x256xf32>
    %41 = vector.shape_cast %40 : vector<1x1x3x256xf32> to vector<3x256xf32>
    %c0_48 = arith.constant 0 : index
    %c24 = arith.constant 24 : index
    %c0_49 = arith.constant 0 : index
    %42 = vector.load %arg3[%c0_48, %c24, %c0_49] : memref<1x36x256xf32, #tpu.memory_space<vmem>>, vector<1x3x256xf32>
    %43 = vector.shape_cast %42 : vector<1x3x256xf32> to vector<3x256xf32>
    %44 = vector.shape_cast %41 : vector<3x256xf32> to vector<1x3x256xf32>
    tpu.vector_store %arg3[%c0_48, %c24, %c0_49], %44 {strides = array<i32>} : memref<1x36x256xf32, #tpu.memory_space<vmem>>, vector<1x3x256xf32>,
    %c0_50 = arith.constant 0 : index
    %c3_51 = arith.constant 3 : index
    %c0_52 = arith.constant 0 : index
    %c0_53 = arith.constant 0 : index
    %45 = vector.load %arg2[%c0_50, %c3_51, %c0_52, %c0_53] : memref<1x4x3x288xf32, #tpu.memory_space<vmem>>, vector<1x1x3x256xf32>
    %46 = vector.shape_cast %45 : vector<1x1x3x256xf32> to vector<3x256xf32>
    %c0_54 = arith.constant 0 : index
    %c27 = arith.constant 27 : index
    %c0_55 = arith.constant 0 : index
    %47 = vector.load %arg3[%c0_54, %c27, %c0_55] : memref<1x36x256xf32, #tpu.memory_space<vmem>>, vector<1x3x256xf32>
    %48 = vector.shape_cast %47 : vector<1x3x256xf32> to vector<3x256xf32>
    %49 = vector.shape_cast %46 : vector<3x256xf32> to vector<1x3x256xf32>
    tpu.vector_store %arg3[%c0_54, %c27, %c0_55], %49 {strides = array<i32>} : memref<1x36x256xf32, #tpu.memory_space<vmem>>, vector<1x3x256xf32>,
    %c0_56 = arith.constant 0 : index
    %c3_57 = arith.constant 3 : index
    %c0_58 = arith.constant 0 : index
    %c16_59 = arith.constant 16 : index
    %50 = vector.load %arg2[%c0_56, %c3_57, %c0_58, %c16_59] : memref<1x4x3x288xf32, #tpu.memory_space<vmem>>, vector<1x1x3x256xf32>
    %51 = vector.shape_cast %50 : vector<1x1x3x256xf32> to vector<3x256xf32>
    %c0_60 = arith.constant 0 : index
    %c30 = arith.constant 30 : index
    %c0_61 = arith.constant 0 : index
    %52 = vector.load %arg3[%c0_60, %c30, %c0_61] : memref<1x36x256xf32, #tpu.memory_space<vmem>>, vector<1x3x256xf32>
    %53 = vector.shape_cast %52 : vector<1x3x256xf32> to vector<3x256xf32>
    %54 = vector.shape_cast %51 : vector<3x256xf32> to vector<1x3x256xf32>
    tpu.vector_store %arg3[%c0_60, %c30, %c0_61], %54 {strides = array<i32>} : memref<1x36x256xf32, #tpu.memory_space<vmem>>, vector<1x3x256xf32>,
    %c0_62 = arith.constant 0 : index
    %c3_63 = arith.constant 3 : index
    %c0_64 = arith.constant 0 : index
    %c32_65 = arith.constant 32 : index
    %55 = vector.load %arg2[%c0_62, %c3_63, %c0_64, %c32_65] : memref<1x4x3x288xf32, #tpu.memory_space<vmem>>, vector<1x1x3x256xf32>
    %56 = vector.shape_cast %55 : vector<1x1x3x256xf32> to vector<3x256xf32>
    %c0_66 = arith.constant 0 : index
    %c33 = arith.constant 33 : index
    %c0_67 = arith.constant 0 : index
    %57 = vector.load %arg3[%c0_66, %c33, %c0_67] : memref<1x36x256xf32, #tpu.memory_space<vmem>>, vector<1x3x256xf32>
    %58 = vector.shape_cast %57 : vector<1x3x256xf32> to vector<3x256xf32>
    %59 = vector.shape_cast %56 : vector<3x256xf32> to vector<1x3x256xf32>
    tpu.vector_store %arg3[%c0_66, %c33, %c0_67], %59 {strides = array<i32>} : memref<1x36x256xf32, #tpu.memory_space<vmem>>, vector<1x3x256xf32>,
    return
  }
  func.func @transform_0(%arg0: i32, %arg1: i32) -> (i32, i32, i32, i32) {
    %c0_i32 = arith.constant 0 : i32
    %c0_i32_0 = arith.constant 0 : i32
    %c0_i32_1 = arith.constant 0 : i32
    return %arg0, %arg1, %c0_i32, %c0_i32_0 : i32, i32, i32, i32
  }
  func.func @transform_1(%arg0: i32, %arg1: i32) -> (i32, i32, i32) {
    %c0_i32 = arith.constant 0 : i32
    %c0_i32_0 = arith.constant 0 : i32
    return %arg0, %arg1, %c0_i32 : i32, i32, i32
  }
}

</mosaic_0001>

<llo_original>
// kernel: global_local_converter.1
$region0: #{global_local_converter.1}
  #allocation0 [shape = 'u32[]', space=smem, size = 0x4, offset = 0x4, fixed_abs, tag = 'smem constant byte address 0x4 - core index']
  #allocation1 [shape = 'u32[144,128]{1,0:T(1,128)}', space=vmem, size = 0x12000, scoped, tag = 'internal scratch']
  %s0 = inlined_call_operand.vmem [shape: f32[2,4,3,288], index: 0, kind: input, shape index: {}]
  %s1 = inlined_call_operand.vmem [shape: f32[2,36,256], index: 1, kind: output, shape index: {}]
  %s2 = sld [smem:[#allocation0]]
  $region37: #{global_local_converter.1} parent=0
    _
  %s4 = ssub.s32 1, %s2
  %s5 = scalar_select 0, %s4, %s2
  loop: start=0, step=1, limit=4
  $region2: #{global_local_converter.1} parent=0 // loop_pre_header
    _
  $region3: #{global_local_converter.1} parent=0 // loop_header
    %s7 = sphi 0, %s11
    %p8 = scmp.ge.s32.totalorder %s7, 4
    %s14 = sphi 0, %s26
    %s15 = sphi 0, %s22
    %s16 = sphi 0, %s14
    %s17 = sphi 0, %s15
    %s18 = sphi 0, %s16
    %s19 = sphi 0, %s17
    %s31 = sphi 0, %s33
    %s34 = sphi 0, %s31
    %s35 = sphi 0, %s34
    %s51 = sphi 0, %s35
    %s59 = sphi 0, %s61
    %s62 = sphi 0, %s59
    %s63 = sphi 0, %s62
    %s79 = sphi 0, %s63
  $region4: #{global_local_converter.1} parent=0 // loop_header_branch
    %10 = sbr.rel (%p8) target = $region8
  $region5: #{global_local_converter.1} parent=0 // loop_body
    %s12 = ssub.s32 %s7, 1
    %s13 = ssub.s32 %s7, 2
    %s20 = sadd.s32 1, %s15
    %p21 = scmp.ge.s32.totalorder %s20, 1
    %s22 = scalar_select %p21, 0, %s20
    %s23 = sadd.s32 1, %s14
    %s24 = scalar_select %p21, %s23, %s14
    %p25 = scmp.ge.s32.totalorder %s24, 2
    %s26 = scalar_select %p25, 0, %s24
    %s27 = ssub.s32 %s14, %s26
    %s28 = ssub.s32 %s15, %s22
    %s29 = sor.u32 %s27, %s28
    %p30 = scmp.eq.s32.totalorder %s29, 0
    %s32 = sadd.s32 %s31, 1
    %s33 = scalar_select %p30, %s31, %s32
    %p36 = pneg %p30
    %p37 = scmp.eq.s32.totalorder %s7, 1
    %p38 = por %p36, %p37
    %p39 = scmp.ne.s32.totalorder %s31, %s34
    %p40 = scmp.eq.s32.totalorder %s7, 0
    %p41 = por %p39, %p40
    %p42 = scmp.ne.s32.totalorder %s31, %s34
    %p43 = scmp.eq.s32.totalorder %s12, 1
    %p44 = por %p42, %p43
    %p45 = scmp.ne.s32.totalorder %s34, %s35
    %p46 = scmp.eq.s32.totalorder %s12, 0
    %p47 = por %p45, %p46
    %p48 = scmp.ne.s32.totalorder %s34, %s35
    %p49 = scmp.eq.s32.totalorder %s13, 1
    %p50 = por %p48, %p49
    %p52 = scmp.ne.s32.totalorder %s35, %s51
    %p53 = scmp.eq.s32.totalorder %s13, 0
    %p54 = por %p52, %p53
    %s55 = ssub.s32 %s14, %s26
    %s56 = ssub.s32 %s15, %s22
    %s57 = sor.u32 %s55, %s56
    %p58 = scmp.eq.s32.totalorder %s57, 0
    %s60 = sadd.s32 %s59, 1
    %s61 = scalar_select %p58, %s59, %s60
    %p64 = pneg %p58
    %p65 = scmp.eq.s32.totalorder %s7, 1
    %p66 = por %p64, %p65
    %p67 = scmp.ne.s32.totalorder %s59, %s62
    %p68 = scmp.eq.s32.totalorder %s7, 0
    %p69 = por %p67, %p68
    %p70 = scmp.ne.s32.totalorder %s59, %s62
    %p71 = scmp.eq.s32.totalorder %s12, 1
    %p72 = por %p70, %p71
    %p73 = scmp.ne.s32.totalorder %s62, %s63
    %p74 = scmp.eq.s32.totalorder %s12, 0
    %p75 = por %p73, %p74
    %p76 = scmp.ne.s32.totalorder %s62, %s63
    %p77 = scmp.eq.s32.totalorder %s13, 1
    %p78 = por %p76, %p77
    %p80 = scmp.ne.s32.totalorder %s63, %s79
    %p81 = scmp.eq.s32.totalorder %s13, 0
    %p82 = por %p80, %p81
    %p83 = scmp.le.s32.totalorder 1, %s7
    %p84 = scmp.lt.s32.totalorder %s7, 3
    %p85 = pnand %p83, %p84
    %p86 = pneg %p85
    // Predicated region
    $region9: #{global_local_converter.1} parent=5 // pred_check
      _
    $region10: #{global_local_converter.1} parent=5 // pred_check_branch
      %88 = sbr.rel (%p85) target = $region12
    $region11: #{global_local_converter.1} parent=5 // pred_region
      %s89 = ssub.s32 %s7, 1
    $region12: #{global_local_converter.1} parent=5 // pred_fallthru
      _
    %p90 = scmp.lt.s32.totalorder %s7, 2
    // Predicated region
    $region13: #{global_local_converter.1} parent=5 // pred_check
      %p91 = pneg %p90
    $region14: #{global_local_converter.1} parent=5 // pred_check_branch
      %93 = sbr.rel (%p91) target = $region16
    $region15: #{global_local_converter.1} parent=5 // pred_region
      // Predicated region
      $region17: #{global_local_converter.1} parent=15 // pred_check
        %p94 = pneg %p41
      $region18: #{global_local_converter.1} parent=15 // pred_check_branch
        %96 = sbr.rel (%p94) target = $region20
      $region19: #{global_local_converter.1} parent=15 // pred_region
        %s97 = smul.u32 4, %s15
        %p98 = scmp.lt.s32.totalorder %s14, 1
        %s99 = scalar_select %p98, %s14, 1
        %p100 = scmp.lt.s32.totalorder %s97, 3
        %s101 = scalar_select %p100, %s97, 3
        %s102 = smul.addr %s101, 3
        %s103 = smul.addr %s99, 12
        %s104 = sadd.s32 %s102, %s103
        %s105 = smul.addr %s104, 4
        %s106 = scalar_lea.vmem %s0, %s105
        %s107 = smul.u32 4, %s15
      $region20: #{global_local_converter.1} parent=15 // pred_fallthru
        _
    $region16: #{global_local_converter.1} parent=5 // pred_fallthru
      _
    %p108 = scmp.le.s32.totalorder 1, %s7
    %p109 = scmp.lt.s32.totalorder %s7, 3
    %p110 = pnand %p108, %p109
    %p111 = pneg %p110
    // Predicated region
    $region21: #{global_local_converter.1} parent=5 // pred_check
      _
    $region22: #{global_local_converter.1} parent=5 // pred_check_branch
      %113 = sbr.rel (%p110) target = $region24
    $region23: #{global_local_converter.1} parent=5 // pred_region
      %s114 = ssub.s32 %s7, 1
      %s115 = smul.u32 4, %s17
      %p116 = scmp.lt.s32.totalorder %s16, 1
      %s117 = scalar_select %p116, %s16, 1
      %p118 = scmp.lt.s32.totalorder %s115, 3
      %s119 = scalar_select %p118, %s115, 3
      %s120 = smul.addr %s119, 3
      %s121 = smul.addr %s117, 12
      %s122 = sadd.s32 %s120, %s121
      %s123 = smul.addr %s122, 4
      %s124 = scalar_lea.vmem %s0, %s123
      %p125 = pneg %p47
      %p126 = pneg %p44
      %p127 = pneg %p75
      %p128 = pneg %p72
      %s129 = smul.u32 5, %s17
      %p130 = scmp.lt.s32.totalorder %s16, 1
      %s131 = scalar_select %p130, %s16, 1
      %p132 = scmp.lt.s32.totalorder %s129, 4
      %s133 = scalar_select %p132, %s129, 4
      %s134 = smul.addr %s133, 2
      %s135 = smul.addr %s131, 10
      %s136 = sadd.s32 %s134, %s135
      %s137 = smul.addr %s136, 8
      %s138 = scalar_lea.vmem %s1, %s137
      %s139 = smul.u32 4, %s17
      %p140 = scmp.lt.s32.totalorder %s16, 1
      %s141 = scalar_select %p140, %s16, 1
      %p142 = scmp.lt.s32.totalorder %s139, 3
      %s143 = scalar_select %p142, %s139, 3
      %s144 = smul.addr %s143, 3
      %s145 = smul.addr %s141, 12
      %s146 = sadd.s32 %s144, %s145
      %s147 = smul.addr %s146, 4
      %s148 = scalar_lea.vmem %s0, %s147
      %s149 = smul.u32 4, %s17
      %s150 = smul.u32 5, %s17
      %p151 = scmp.lt.s32.totalorder %s16, 1
      %s152 = scalar_select %p151, %s16, 1
      %p153 = scmp.lt.s32.totalorder %s150, 4
      %s154 = scalar_select %p153, %s150, 4
      %s155 = smul.addr %s154, 2
      %s156 = smul.addr %s152, 10
      %s157 = sadd.s32 %s155, %s156
      %s158 = smul.addr %s157, 8
      %s159 = scalar_lea.vmem %s1, %s158
      %s160 = smul.u32 5, %s17
      %v161 = vld [vmem:[%s148] sm:$0x77]
      %v163 = vcombine.high %v161, %v161
      %165 = vst [vmem:[%s159] sm:$0x7] %v161
      %166 = vst [vmem:[%s159 + $0x8] sm:$0x7] %v163
      %v167 = vld [vmem:[%s148] sm:$0x77]
      %v168 = vld [vmem:[%s148 + $0x8] sm:$0x7]
      %v171 = vcombine.high %v167, %v167
      %v172 = vrot.slane %v167, 5
      %v173 = vrot.slane %v171, 5
      %v174 = vrot.slane %v168, 5
      %175 = vrot.lane.b32.xlu0 %v172, 112
      %v176 = vpop.permute.xlu0 %175
      %177 = vrot.lane.b32.xlu0 %v173, 112
      %v178 = vpop.permute.xlu0 %177
      %179 = vrot.lane.b32.xlu0 %v174, 112
      %v180 = vpop.permute.xlu0 %179
      %vm181 = vcmask 916480
      %v182 = vsel %vm181, %v176, %v178
      %v183 = vsel %vm181, %v178, %v180
      %186 = vst [vmem:[%s159] sm:$0x38] %v182
      %187 = vst [vmem:[%s159 + $0x8] sm:$0x38] %v183
      %v188 = vld [vmem:[%s148] sm:$0x77]
      %v189 = vld [vmem:[%s148 + $0x8] sm:$0x7]
      %v192 = vcombine.high %v188, %v188
      %v193 = vrot.slane %v188, 2
      %v194 = vrot.slane %v192, 2
      %v195 = vrot.slane %v189, 2
      %196 = vrot.lane.b32.xlu0 %v193, 96
      %v197 = vpop.permute.xlu0 %196
      %198 = vrot.lane.b32.xlu0 %v194, 96
      %v199 = vpop.permute.xlu0 %198
      %200 = vrot.lane.b32.xlu0 %v195, 96
      %v201 = vpop.permute.xlu0 %200
      %vm202 = vcmask 785408
      %v203 = vsel %vm202, %v197, %v199
      %v204 = vsel %vm202, %v199, %v201
      %207 = vst [vmem:[%s159] sm:$0xc0] %v203
      %208 = vst [vmem:[%s159 + $0x8] sm:$0xc0] %v204
      %209 = vst [vmem:[%s159 + $0x10] sm:$0x1] %v203
      %210 = vst [vmem:[%s159 + $0x18] sm:$0x1] %v204
      %s211 = scalar_lea.vmem %s148, 12
      %v212 = vld [vmem:[%s211] sm:$0x77]
      %v214 = vcombine.high %v212, %v212
      %v215 = vrot.slane %v212, 7
      %v216 = vrot.slane %v214, 7
      %219 = vst [vmem:[%s159 + $0x10] sm:$0xe] %v215
      %220 = vst [vmem:[%s159 + $0x18] sm:$0xe] %v216
      %v221 = vld [vmem:[%s211] sm:$0x77]
      %v222 = vld [vmem:[%s211 + $0x8] sm:$0x7]
      %v225 = vcombine.low %v221, %v221
      %v226 = vcombine.low %v222, %v222
      %227 = vrot.lane.b32.xlu0 %v225, 112
      %v228 = vpop.permute.xlu0 %227
      %229 = vrot.lane.b32.xlu0 %v221, 112
      %v230 = vpop.permute.xlu0 %229
      %231 = vrot.lane.b32.xlu0 %v226, 112
      %v232 = vpop.permute.xlu0 %231
      %v233 = vsel %vm181, %v228, %v230
      %v234 = vsel %vm181, %v230, %v232
      %237 = vst [vmem:[%s159 + $0x10] sm:$0x70] %v233
      %238 = vst [vmem:[%s159 + $0x18] sm:$0x70] %v234
      %v239 = vld [vmem:[%s211] sm:$0x77]
      %v240 = vld [vmem:[%s211 + $0x8] sm:$0x7]
      %v243 = vcombine.high %v239, %v239
      %v244 = vrot.slane %v239, 1
      %v245 = vrot.slane %v243, 1
      %v246 = vrot.slane %v240, 1
      %247 = vrot.lane.b32.xlu0 %v244, 96
      %v248 = vpop.permute.xlu0 %247
      %249 = vrot.lane.b32.xlu0 %v245, 96
      %v250 = vpop.permute.xlu0 %249
      %251 = vrot.lane.b32.xlu0 %v246, 96
      %v252 = vpop.permute.xlu0 %251
      %v253 = vsel %vm202, %v248, %v250
      %v254 = vsel %vm202, %v250, %v252
      %257 = vst [vmem:[%s159 + $0x10] sm:$0x80] %v253
      %258 = vst [vmem:[%s159 + $0x18] sm:$0x80] %v254
      %259 = vst [vmem:[%s159 + $0x20] sm:$0x3] %v253
      %260 = vst [vmem:[%s159 + $0x28] sm:$0x3] %v254
      %s261 = scalar_lea.vmem %s148, 24
      %v262 = vld [vmem:[%s261] sm:$0x77]
      %v264 = vcombine.high %v262, %v262
      %v265 = vrot.slane %v262, 6
      %v266 = vrot.slane %v264, 6
      %269 = vst [vmem:[%s159 + $0x20] sm:$0x1c] %v265
      %270 = vst [vmem:[%s159 + $0x28] sm:$0x1c] %v266
      %v271 = vld [vmem:[%s261] sm:$0x77]
      %v272 = vld [vmem:[%s261 + $0x8] sm:$0x7]
      %v275 = vcombine.high %v271, %v271
      %v276 = vrot.slane %v271, 3
      %v277 = vrot.slane %v275, 3
      %v278 = vrot.slane %v272, 3
      %279 = vrot.lane.b32.xlu0 %v276, 112
      %v280 = vpop.permute.xlu0 %279
      %281 = vrot.lane.b32.xlu0 %v277, 112
      %v282 = vpop.permute.xlu0 %281
      %283 = vrot.lane.b32.xlu0 %v278, 112
      %v284 = vpop.permute.xlu0 %283
      %v285 = vsel %vm181, %v280, %v282
      %v286 = vsel %vm181, %v282, %v284
      %289 = vst [vmem:[%s159 + $0x20] sm:$0xe0] %v285
      %290 = vst [vmem:[%s159 + $0x28] sm:$0xe0] %v286
      %v291 = vld [vmem:[%s261] sm:$0x77]
      %v292 = vld [vmem:[%s261 + $0x8] sm:$0x7]
      %v295 = vcombine.high %v291, %v291
      %296 = vrot.lane.b32.xlu0 %v291, 96
      %v297 = vpop.permute.xlu0 %296
      %298 = vrot.lane.b32.xlu0 %v295, 96
      %v299 = vpop.permute.xlu0 %298
      %300 = vrot.lane.b32.xlu0 %v292, 96
      %v301 = vpop.permute.xlu0 %300
      %v302 = vsel %vm202, %v297, %v299
      %v303 = vsel %vm202, %v299, %v301
      %306 = vst [vmem:[%s159 + $0x30] sm:$0x7] %v302
      %307 = vst [vmem:[%s159 + $0x38] sm:$0x7] %v303
      %s308 = scalar_lea.vmem %s148, 36
      %v309 = vld [vmem:[%s308] sm:$0x77]
      %v311 = vcombine.high %v309, %v309
      %v312 = vrot.slane %v309, 5
      %v313 = vrot.slane %v311, 5
      %316 = vst [vmem:[%s159 + $0x30] sm:$0x38] %v312
      %317 = vst [vmem:[%s159 + $0x38] sm:$0x38] %v313
      %v318 = vld [vmem:[%s308] sm:$0x77]
      %v319 = vld [vmem:[%s308 + $0x8] sm:$0x7]
      %v322 = vcombine.high %v318, %v318
      %v323 = vrot.slane %v318, 2
      %v324 = vrot.slane %v322, 2
      %v325 = vrot.slane %v319, 2
      %326 = vrot.lane.b32.xlu0 %v323, 112
      %v327 = vpop.permute.xlu0 %326
      %328 = vrot.lane.b32.xlu0 %v324, 112
      %v329 = vpop.permute.xlu0 %328
      %330 = vrot.lane.b32.xlu0 %v325, 112
      %v331 = vpop.permute.xlu0 %330
      %v332 = vsel %vm181, %v327, %v329
      %v333 = vsel %vm181, %v329, %v331
      %336 = vst [vmem:[%s159 + $0x30] sm:$0xc0] %v332
      %337 = vst [vmem:[%s159 + $0x38] sm:$0xc0] %v333
      %338 = vst [vmem:[%s159 + $0x40] sm:$0x1] %v332
      %339 = vst [vmem:[%s159 + $0x48] sm:$0x1] %v333
      %v340 = vld [vmem:[%s308] sm:$0x77]
      %v341 = vld [vmem:[%s308 + $0x8] sm:$0x7]
      %v344 = vcombine.high %v340, %v340
      %v345 = vrot.slane %v340, 7
      %v346 = vrot.slane %v344, 7
      %v347 = vrot.slane %v341, 7
      %348 = vrot.lane.b32.xlu0 %v345, 96
      %v349 = vpop.permute.xlu0 %348
      %350 = vrot.lane.b32.xlu0 %v346, 96
      %v351 = vpop.permute.xlu0 %350
      %352 = vrot.lane.b32.xlu0 %v347, 96
      %v353 = vpop.permute.xlu0 %352
      %v354 = vsel %vm202, %v349, %v351
      %v355 = vsel %vm202, %v351, %v353
      %358 = vst [vmem:[%s159 + $0x40] sm:$0xe] %v354
      %359 = vst [vmem:[%s159 + $0x48] sm:$0xe] %v355
      %s360 = smul.u32 5, %s17
      %p361 = scmp.lt.s32.totalorder %s16, 1
      %s362 = scalar_select %p361, %s16, 1
      %p363 = scmp.lt.s32.totalorder %s360, 4
      %s364 = scalar_select %p363, %s360, 4
      %s365 = smul.addr %s364, 2
      %s366 = smul.addr %s362, 10
      %s367 = sadd.s32 %s365, %s366
      %s368 = smul.addr %s367, 8
      %s369 = scalar_lea.vmem %s1, %s368
      // Predicated region
      $region25: #{global_local_converter.1} parent=23 // pred_check
        %p370 = pneg %p72
      $region26: #{global_local_converter.1} parent=23 // pred_check_branch
        %372 = sbr.rel (%p370) target = $region28
      $region27: #{global_local_converter.1} parent=23 // pred_region
        %s373 = smul.u32 5, %s17
      $region28: #{global_local_converter.1} parent=23 // pred_fallthru
        _
    $region24: #{global_local_converter.1} parent=5 // pred_fallthru
      _
    %p374 = scmp.le.s32.totalorder 2, %s7
    // Predicated region
    $region29: #{global_local_converter.1} parent=5 // pred_check
      %p375 = pneg %p374
    $region30: #{global_local_converter.1} parent=5 // pred_check_branch
      %377 = sbr.rel (%p375) target = $region32
    $region31: #{global_local_converter.1} parent=5 // pred_region
      %s378 = ssub.s32 %s7, 2
      // Predicated region
      $region33: #{global_local_converter.1} parent=31 // pred_check
        %p379 = pneg %p78
      $region34: #{global_local_converter.1} parent=31 // pred_check_branch
        %381 = sbr.rel (%p379) target = $region36
      $region35: #{global_local_converter.1} parent=31 // pred_region
        %s382 = smul.u32 5, %s19
        %p383 = scmp.lt.s32.totalorder %s18, 1
        %s384 = scalar_select %p383, %s18, 1
        %p385 = scmp.lt.s32.totalorder %s382, 4
        %s386 = scalar_select %p385, %s382, 4
        %s387 = smul.addr %s386, 2
        %s388 = smul.addr %s384, 10
        %s389 = sadd.s32 %s387, %s388
        %s390 = smul.addr %s389, 8
        %s391 = scalar_lea.vmem %s1, %s390
      $region36: #{global_local_converter.1} parent=31 // pred_fallthru
        _
    $region32: #{global_local_converter.1} parent=5 // pred_fallthru
      _
  $region6: #{global_local_converter.1} parent=0 // loop_footer
    %s11 = sadd.s32 1, %s7
  $region7: #{global_local_converter.1} parent=0 // loop_footer_branch
    %6 = sbr.rel target = $region3
  $region8: #{global_local_converter.1} parent=0 // loop_exit
    _

</llo_original>
